<compile_context>
chip_gen: v6e
topology: v6e:2x2x1
jax: 0.10.0
libtpu: 0.0.40
codegen_flags: <defaults>
</compile_context>

<pallas_src>
import numpy as np
import jax
import jax.numpy as jnp
from jax.experimental import pallas as pl
from jax.experimental.pallas import tpu as pltpu

TRIP_COLS = ['tod', 'road', 'road_prop', 'lng', 'lat', 'weekday', 'seq_i']

_LANES = 128            # TPU vreg lane width
_TILE_BYTES = 4 << 20   # target bytes per input row-block (dtype-aware row count)


def _make_affine(stat, feat_cols, feat_names, num_feats, norm_type='zscore'):
    """Fold per-column normalization into (sub, mul, add):  y = (x - sub) * mul + add.

    zscore:  sub=mean, mul=1/std,        add=0
    minmax:  sub=min,  mul=2/(max-min),  add=-1
    Columns not in feat_cols are identity (sub=0, mul=1, add=0)."""
    sub = np.zeros((num_feats,), dtype=np.float32)
    mul = np.ones((num_feats,), dtype=np.float32)
    add = np.zeros((num_feats,), dtype=np.float32)
    for col, name in zip(feat_cols, feat_names):
        if norm_type == 'zscore':
            sub[col] = float(stat['mean'][name])
            mul[col] = 1.0 / float(stat['std'][name])
            add[col] = 0.0
        elif norm_type == 'minmax':
            mn = float(stat['min'][name])
            mx = float(stat['max'][name])
            sub[col] = mn
            mul[col] = 2.0 / (mx - mn)
            add[col] = -1.0
        else:
            raise NotImplementedError(norm_type)
    return jnp.asarray(sub), jnp.asarray(mul), jnp.asarray(add)


def _normalizer_kernel(x_ref, sub_ref, mul_ref, add_ref, o_ref):
    # Subtract-first fused affine in f32; (1, W) params broadcast over the row tile.
    x = x_ref[...].astype(jnp.float32)
    y = (x - sub_ref[...]) * mul_ref[...] + add_ref[...]
    o_ref[...] = y.astype(o_ref.dtype)


def _pick_tile_rows(n_rows, row_bytes, max_tile_rows=None):
    """Pick a packed-row tile: ~_TILE_BYTES per input block, multiple of 8,
    and at least 2 blocks when possible so 'parallel' shards over both TCs."""
    if n_rows <= 8:
        return n_rows                                   # single full-extent block
    tile = max(8, (_TILE_BYTES // row_bytes) // 8 * 8)  # dtype-aware byte budget
    if max_tile_rows is not None:
        tile = min(tile, max(8, (int(max_tile_rows) // 8) * 8))
    half = ((n_rows + 1) // 2 + 7) // 8 * 8             # ceil(n_rows/2), rounded to 8
    return max(8, min(tile, half))


def normalizer_forward(x, sub, mul, add, *, max_tile_rows=None):
    """x: [..., F] float array; sub/mul/add: (F,) float32 affine parameters."""
    orig_shape = x.shape
    F = int(orig_shape[-1])
    total = int(np.prod(orig_shape)) if len(orig_shape) > 0 else 1

    # --- Lane-dense repacking -------------------------------------------------
    # Flatten row-major and view as (rows, F*128): each packed row holds 128
    # consecutive feature rows, so all 128 lanes are occupied and the per-column
    # params repeat with period F along the lane axis (F*128 is a multiple of F).
    W = F * _LANES
    x_flat = jnp.reshape(x, (-1,))
    rem = total % W
    if rem == 0:
        # Zero-copy fast path: no pad, no output slice.
        n_rows = total // W
        x2 = x_flat.reshape(n_rows, W)
    else:
        # Ragged tail (< F*128 elements): pad the flat tail up to one packed row.
        # TODO(synk): for very large ragged inputs the pad + output slice cost ~2
        # extra HBM passes; keep prod(shape) % (F*128) == 0 for the zero-copy path.
        n_rows = total // W + 1
        x2 = jnp.pad(x_flat, (0, n_rows * W - total)).reshape(n_rows, W)

    itemsize = np.dtype(x.dtype).itemsize
    tile_rows = _pick_tile_rows(n_rows, W * itemsize, max_tile_rows)
    grid = (pl.cdiv(n_rows, tile_rows),)   # ragged last block is masked by Pallas

    # Per-lane affine params: position p in a packed row is feature (p % F).
    sub_row = jnp.tile(jnp.asarray(sub, jnp.float32), _LANES).reshape(1, W)
    mul_row = jnp.tile(jnp.asarray(mul, jnp.float32), _LANES).reshape(1, W)
    add_row = jnp.tile(jnp.asarray(add, jnp.float32), _LANES).reshape(1, W)

    out = pl.pallas_call(
        _normalizer_kernel,
        out_shape=jax.ShapeDtypeStruct((n_rows, W), x.dtype),
        grid=grid,
        in_specs=[
            pl.BlockSpec((tile_rows, W), lambda i: (i, 0)),   # row tile, pipelined
            pl.BlockSpec((1, W), lambda i: (0, 0)),           # sub pinned
            pl.BlockSpec((1, W), lambda i: (0, 0)),           # mul pinned
            pl.BlockSpec((1, W), lambda i: (0, 0)),           # add pinned
        ],
        out_specs=pl.BlockSpec((tile_rows, W), lambda i: (i, 0)),
        compiler_params=pltpu.CompilerParams(
            dimension_semantics=("parallel",),   # shard row tiles across TCs (v7x)
            vmem_limit_bytes=48 << 20,           # headroom for ~4 MiB blocks, all gens
        ),
    )(x2, sub_row, mul_row, add_row)

    out_flat = out.reshape(-1)
    if rem != 0:
        out_flat = out_flat[:total]
    return out_flat.reshape(orig_shape)


def _reference(x, stat, feat_cols, feat_names, norm_type):
    ref = np.array(x, dtype=np.float32)
    for col, name in zip(feat_cols, feat_names):
        if norm_type == 'zscore':
            ref[..., col] = (ref[..., col] - stat['mean'][name]) / stat['std'][name]
        else:
            mn, mx = stat['min'][name], stat['max'][name]
            ref[..., col] = ((ref[..., col] - mn) / (mx - mn)) * 2 - 1
    return ref


if __name__ == "__main__":
    # Deterministic synthetic stats (stand-in for the pandas DataFrame `stat`).
    feat_cols = [0, 2, 3, 4]                         # tod, road_prop, lng, lat
    feat_names = [TRIP_COLS[c] for c in feat_cols]
    num_feats = len(TRIP_COLS)                       # F = 7
    stat = {
        'mean': {'tod': 12.0, 'road_prop': 0.5, 'lng': 116.4, 'lat': 39.9},
        'std':  {'tod': 6.0,  'road_prop': 0.3, 'lng': 0.2,   'lat': 0.1},
        'min':  {'tod': 0.0,  'road_prop': 0.0, 'lng': 116.0, 'lat': 39.6},
        'max':  {'tod': 24.0, 'road_prop': 1.0, 'lng': 116.8, 'lat': 40.2},
    }

    key = jax.random.PRNGKey(0)
    k1, k2, k3 = jax.random.split(key, 3)

    sub_z, mul_z, add_z = _make_affine(stat, feat_cols, feat_names, num_feats, 'zscore')
    sub_m, mul_m, add_m = _make_affine(stat, feat_cols, feat_names, num_feats, 'minmax')

    # Check 1: zscore, zero-copy fast path (2*128*7 = 2 packed rows, single block).
    x1 = jax.random.normal(k1, (2, 128, num_feats), dtype=jnp.float32) * 10.0 + 50.0
    out1 = jax.block_until_ready(normalizer_forward(x1, sub_z, mul_z, add_z))
    np.testing.assert_allclose(
        np.array(out1), _reference(x1, stat, feat_cols, feat_names, 'zscore'),
        rtol=1e-5, atol=1e-5)

    # Check 2: minmax on the same shape.
    out2 = jax.block_until_ready(normalizer_forward(x1, sub_m, mul_m, add_m))
    np.testing.assert_allclose(
        np.array(out2), _reference(x1, stat, feat_cols, feat_names, 'minmax'),
        rtol=1e-4, atol=1e-5)

    # Check 3: ragged total (8400 % 896 != 0) + ragged last row-block:
    # 10 packed rows, forced tile=8 -> grid=2 with a masked partial last block.
    x3 = jax.random.normal(k2, (4, 300, num_feats), dtype=jnp.float32) * 5.0 + 40.0
    out3 = jax.block_until_ready(normalizer_forward(x3, sub_z, mul_z, add_z,
                                                    max_tile_rows=8))
    np.testing.assert_allclose(
        np.array(out3), _reference(x3, stat, feat_cols, feat_names, 'zscore'),
        rtol=1e-5, atol=1e-5)

    # Check 4: zero-copy multi-block path with default tiling
    # (8*512*7 = 32 packed rows -> tile=16, grid=2, "parallel" over TCs).
    x4 = jax.random.normal(k3, (8, 512, num_feats), dtype=jnp.float32) * 3.0 + 45.0
    out4 = jax.block_until_ready(normalizer_forward(x4, sub_z, mul_z, add_z))
    np.testing.assert_allclose(
        np.array(out4), _reference(x4, stat, feat_cols, feat_names, 'zscore'),
        rtol=1e-5, atol=1e-5)

    print("KERNEL_OK")
</pallas_src>

<mosaic_0001>
module attributes {stable_mosaic.version = 11 : i64} {
  func.func @_normalizer_kernel(%arg0: i32, %arg1: memref<2x896xf32, #tpu.memory_space<vmem>>, %arg2: memref<1x896xf32, #tpu.memory_space<vmem>>, %arg3: memref<1x896xf32, #tpu.memory_space<vmem>>, %arg4: memref<1x896xf32, #tpu.memory_space<vmem>>, %arg5: memref<2x896xf32, #tpu.memory_space<vmem>>) attributes {dimension_semantics = [#tpu.dimension_semantics<parallel>], iteration_bounds = array<i64: 1>, scalar_prefetch = 0 : i64, scratch_operands = 0 : i64, tpu.core_type = #tpu.core_type<tc>, window_params = [{transform_indices = @transform_0, window_bounds = array<i64: 2, 896>}, {pipeline_mode = #tpu.pipeline_mode<synchronous>, transform_indices = @transform_1, window_bounds = array<i64: 1, 896>}, {pipeline_mode = #tpu.pipeline_mode<synchronous>, transform_indices = @transform_2, window_bounds = array<i64: 1, 896>}, {pipeline_mode = #tpu.pipeline_mode<synchronous>, transform_indices = @transform_3, window_bounds = array<i64: 1, 896>}, {transform_indices = @transform_4, window_bounds = array<i64: 2, 896>}]} {
    %c0 = arith.constant 0 : index
    %c0_0 = arith.constant 0 : index
    %0 = vector.load %arg1[%c0, %c0_0] : memref<2x896xf32, #tpu.memory_space<vmem>>, vector<2x896xf32>
    %c0_1 = arith.constant 0 : index
    %c0_2 = arith.constant 0 : index
    %1 = vector.load %arg2[%c0_1, %c0_2] : memref<1x896xf32, #tpu.memory_space<vmem>>, vector<1x896xf32>
    %2 = vector.broadcast %1 : vector<1x896xf32> to vector<2x896xf32>
    %3 = arith.subf %0, %2 : vector<2x896xf32>
    %c0_3 = arith.constant 0 : index
    %c0_4 = arith.constant 0 : index
    %4 = vector.load %arg3[%c0_3, %c0_4] : memref<1x896xf32, #tpu.memory_space<vmem>>, vector<1x896xf32>
    %5 = vector.broadcast %4 : vector<1x896xf32> to vector<2x896xf32>
    %6 = arith.mulf %3, %5 : vector<2x896xf32>
    %c0_5 = arith.constant 0 : index
    %c0_6 = arith.constant 0 : index
    %7 = vector.load %arg4[%c0_5, %c0_6] : memref<1x896xf32, #tpu.memory_space<vmem>>, vector<1x896xf32>
    %8 = vector.broadcast %7 : vector<1x896xf32> to vector<2x896xf32>
    %9 = arith.addf %6, %8 : vector<2x896xf32>
    %c0_7 = arith.constant 0 : index
    %c0_8 = arith.constant 0 : index
    %10 = vector.load %arg5[%c0_7, %c0_8] : memref<2x896xf32, #tpu.memory_space<vmem>>, vector<2x896xf32>
    tpu.vector_store %arg5[%c0_7, %c0_8], %9 {strides = array<i32>} : memref<2x896xf32, #tpu.memory_space<vmem>>, vector<2x896xf32>,
    return
  }
  func.func @transform_0(%arg0: i32) -> (i32, i32) {
    %c0_i32 = arith.constant 0 : i32
    %c0_i32_0 = arith.constant 0 : i32
    return %arg0, %c0_i32 : i32, i32
  }
  func.func @transform_1(%arg0: i32) -> (i32, i32) {
    %c0_i32 = arith.constant 0 : i32
    %c0_i32_0 = arith.constant 0 : i32
    %c0_i32_1 = arith.constant 0 : i32
    return %c0_i32, %c0_i32_0 : i32, i32
  }
  func.func @transform_2(%arg0: i32) -> (i32, i32) {
    %c0_i32 = arith.constant 0 : i32
    %c0_i32_0 = arith.constant 0 : i32
    %c0_i32_1 = arith.constant 0 : i32
    return %c0_i32, %c0_i32_0 : i32, i32
  }
  func.func @transform_3(%arg0: i32) -> (i32, i32) {
    %c0_i32 = arith.constant 0 : i32
    %c0_i32_0 = arith.constant 0 : i32
    %c0_i32_1 = arith.constant 0 : i32
    return %c0_i32, %c0_i32_0 : i32, i32
  }
  func.func @transform_4(%arg0: i32) -> (i32, i32) {
    %c0_i32 = arith.constant 0 : i32
    %c0_i32_0 = arith.constant 0 : i32
    return %arg0, %c0_i32 : i32, i32
  }
}

</mosaic_0001>

<llo_original>
// kernel: tpu_custom_call.1
$region0: #{tpu_custom_call.1}
  #allocation0 [shape = 'u32[]', space=smem, size = 0x4, offset = 0x4, fixed_abs, tag = 'smem constant byte address 0x4 - core index']
  #allocation1 [shape = 'u32[144,128]{1,0:T(1,128)}', space=vmem, size = 0x12000, scoped, tag = 'internal scratch']
  %s0 = inlined_call_operand.hbm [shape: f32[2,896], index: 0, kind: input, shape index: {}]
  %s1 = inlined_call_operand.hbm [shape: f32[1,896], index: 1, kind: input, shape index: {}]
  %s2 = inlined_call_operand.hbm [shape: f32[1,896], index: 2, kind: input, shape index: {}]
  %s3 = inlined_call_operand.hbm [shape: f32[1,896], index: 3, kind: input, shape index: {}]
  %s4 = inlined_call_operand.hbm [shape: f32[2,896], index: 4, kind: output, shape index: {}]
  %s5 = sld [smem:[#allocation0]]
  $region42: #{tpu_custom_call.1} parent=0
    _
  %s7 = ssub.s32 1, %s5
  %s8 = scalar_select 0, %s7, %s5
  $region1: #{tpu_custom_call.1} parent=0
    #allocation2 [shape = 'u8[7168]{0}', space=vmem, size = 0x1c00, scoped, tag = 'input window, operand 0, single buffered']
    #allocation3 [shape = 's32[1]{0}', space=sflag, size = 0x4, scoped, tag = 'scoped memory for tpu_custom_call.1']
    #allocation4 [shape = 's32[1]{0}', space=sflag, size = 0x4, scoped, tag = 'scoped memory for tpu_custom_call.1']
    #allocation5 [shape = 'u8[3584]{0}', space=vmem, size = 0x1000, scoped, tag = 'input window, operand 1, single buffered']
    #allocation6 [shape = 's32[1]{0}', space=sflag, size = 0x4, scoped, tag = 'scoped memory for tpu_custom_call.1']
    #allocation7 [shape = 'u8[3584]{0}', space=vmem, size = 0x1000, scoped, tag = 'input window, operand 2, single buffered']
    #allocation8 [shape = 'u8[3584]{0}', space=vmem, size = 0x1000, scoped, tag = 'input window, operand 3, single buffered']
    #allocation9 [shape = 's32[1]{0}', space=sflag, size = 0x4, scoped, tag = 'scoped memory for tpu_custom_call.1']
    #allocation10 [shape = 'u8[7168]{0}', space=vmem, size = 0x1c00, scoped, tag = 'output window, operand 0, single buffered']
    %9 = vsyncpa [#allocation3], 0
    %10 = vsyncpa [#allocation6], 0
    %11 = vsyncpa [#allocation9], 0
    %12 = vsyncpa [#allocation4], 0
    // Predicated region
    $region2: #{tpu_custom_call.1} parent=1 // pred_check
      _
    $region3: #{tpu_custom_call.1} parent=1 // pred_check_branch
      %14 = sbr.rel (0) target = $region5
    $region4: #{tpu_custom_call.1} parent=1 // pred_region
      %s16 = ssub.s32 224, 224
      %17 = vsyncadd [#allocation3], %s16
      %s19 = sshll.u32 [#allocation2], 4
      %s20 = int_to_ptr.vmem [resolvable:$true] %s19
      %22 = dma.hbm_to_vmem [thread:$0]  %s0, 224, %s20, [#allocation3]
    $region5: #{tpu_custom_call.1} parent=1 // pred_fallthru
      _
    // Predicated region
    $region6: #{tpu_custom_call.1} parent=1 // pred_check
      _
    $region7: #{tpu_custom_call.1} parent=1 // pred_check_branch
      %24 = sbr.rel (0) target = $region9
    $region8: #{tpu_custom_call.1} parent=1 // pred_region
      %s26 = ssub.s32 112, 112
      %27 = vsyncadd [#allocation6], %s26
      %s29 = sshll.u32 [#allocation5], 4
      %s30 = int_to_ptr.vmem [resolvable:$true] %s29
      %32 = dma.hbm_to_vmem [thread:$0]  %s1, 112, %s30, [#allocation6]
    $region9: #{tpu_custom_call.1} parent=1 // pred_fallthru
      _
    // Predicated region
    $region10: #{tpu_custom_call.1} parent=1 // pred_check
      _
    $region11: #{tpu_custom_call.1} parent=1 // pred_check_branch
      %34 = sbr.rel (0) target = $region13
    $region12: #{tpu_custom_call.1} parent=1 // pred_region
      %s36 = ssub.s32 112, 112
      %37 = vsyncadd [#allocation6], %s36
      %s39 = sshll.u32 [#allocation7], 4
      %s40 = int_to_ptr.vmem [resolvable:$true] %s39
      %42 = dma.hbm_to_vmem [thread:$0]  %s2, 112, %s40, [#allocation6]
    $region13: #{tpu_custom_call.1} parent=1 // pred_fallthru
      _
    // Predicated region
    $region14: #{tpu_custom_call.1} parent=1 // pred_check
      _
    $region15: #{tpu_custom_call.1} parent=1 // pred_check_branch
      %44 = sbr.rel (0) target = $region17
    $region16: #{tpu_custom_call.1} parent=1 // pred_region
      %s46 = ssub.s32 112, 112
      %47 = vsyncadd [#allocation9], %s46
      %s49 = sshll.u32 [#allocation8], 4
      %s50 = int_to_ptr.vmem [resolvable:$true] %s49
      %52 = dma.hbm_to_vmem [thread:$0]  %s3, 112, %s50, [#allocation9]
    $region17: #{tpu_custom_call.1} parent=1 // pred_fallthru
      _
    // Predicated region
    $region18: #{tpu_custom_call.1} parent=1 // pred_check
      _
    $region19: #{tpu_custom_call.1} parent=1 // pred_check_branch
      %54 = sbr.rel (0) target = $region21
    $region20: #{tpu_custom_call.1} parent=1 // pred_region
      %55 = dma.done [#allocation3], 224
    $region21: #{tpu_custom_call.1} parent=1 // pred_fallthru
      _
    // Predicated region
    $region22: #{tpu_custom_call.1} parent=1 // pred_check
      _
    $region23: #{tpu_custom_call.1} parent=1 // pred_check_branch
      %57 = sbr.rel (0) target = $region25
    $region24: #{tpu_custom_call.1} parent=1 // pred_region
      %58 = dma.done [#allocation6], 112
    $region25: #{tpu_custom_call.1} parent=1 // pred_fallthru
      _
    // Predicated region
    $region26: #{tpu_custom_call.1} parent=1 // pred_check
      _
    $region27: #{tpu_custom_call.1} parent=1 // pred_check_branch
      %60 = sbr.rel (0) target = $region29
    $region28: #{tpu_custom_call.1} parent=1 // pred_region
      %61 = dma.done [#allocation6], 112
    $region29: #{tpu_custom_call.1} parent=1 // pred_fallthru
      _
    // Predicated region
    $region30: #{tpu_custom_call.1} parent=1 // pred_check
      _
    $region31: #{tpu_custom_call.1} parent=1 // pred_check_branch
      %63 = sbr.rel (0) target = $region33
    $region32: #{tpu_custom_call.1} parent=1 // pred_region
      %64 = dma.done [#allocation9], 112
    $region33: #{tpu_custom_call.1} parent=1 // pred_fallthru
      _
    %v65 = vld [vmem:[#allocation2] sm:$0xff]
    %v66 = vld [vmem:[#allocation2 + $0x8] sm:$0x3f]
    %v67 = vld [vmem:[#allocation5] sm:$0xff]
    %v69 = vlaneseq
    %v70 = vshrl.u32 %v69, 7
    %v71 = vsub.s32 0, %v70
    %v72 = vrot.slane %v67, %v71
    %v73 = vlaneseq
    %v74 = vshrl.u32 %v73, 7
    %v75 = vsub.s32 1, %v74
    %v76 = vrot.slane %v67, %v75
    %v77 = vlaneseq
    %v78 = vshrl.u32 %v77, 7
    %v79 = vsub.s32 2, %v78
    %v80 = vrot.slane %v67, %v79
    %v81 = vlaneseq
    %v82 = vshrl.u32 %v81, 7
    %v83 = vsub.s32 3, %v82
    %v84 = vrot.slane %v67, %v83
    %v85 = vlaneseq
    %v86 = vshrl.u32 %v85, 7
    %v87 = vsub.s32 4, %v86
    %v88 = vrot.slane %v67, %v87
    %v89 = vlaneseq
    %v90 = vshrl.u32 %v89, 7
    %v91 = vsub.s32 5, %v90
    %v92 = vrot.slane %v67, %v91
    %v93 = vlaneseq
    %v94 = vshrl.u32 %v93, 7
    %v95 = vsub.s32 6, %v94
    %v96 = vrot.slane %v67, %v95
    %v97 = vcombine.low %v72, %v76
    %v98 = vcombine.low %v80, %v84
    %v100 = vunpack.c.l.s4 1983009808
    %v101 = vunpack.c.0.s8 %v100
    %v102 = vlaneseq
    %v103 = vshrl.u32 %v102, 7
    %v104 = vsub.s32 %v101, %v103
    %v105 = vrot.slane %v97, %v104
    %v107 = vunpack.c.l.s4 1983009808
    %v108 = vunpack.c.0.s8 %v107
    %v109 = vlaneseq
    %v110 = vshrl.u32 %v109, 7
    %v111 = vsub.s32 %v108, %v110
    %v112 = vrot.slane %v98, %v111
    %v113 = vcombine.low %v105, %v112
    %v114 = vcombine.low %v88, %v92
    %v116 = vunpack.c.l.s4 1983009808
    %v117 = vunpack.c.0.s8 %v116
    %v118 = vlaneseq
    %v119 = vshrl.u32 %v118, 7
    %v120 = vsub.s32 %v117, %v119
    %v121 = vrot.slane %v114, %v120
    %v123 = vunpack.c.l.s4 1983009808
    %v124 = vunpack.c.0.s8 %v123
    %v125 = vlaneseq
    %v126 = vshrl.u32 %v125, 7
    %v127 = vsub.s32 %v124, %v126
    %v128 = vrot.slane %v96, %v127
    %v129 = vcombine.low %v121, %v128
    %v132 = vsub.f32 %v65, %v113
    %v133 = vsub.f32 %v66, %v129
    %v134 = vld [vmem:[#allocation7] sm:$0xff]
    %v136 = vlaneseq
    %v137 = vshrl.u32 %v136, 7
    %v138 = vsub.s32 0, %v137
    %v139 = vrot.slane %v134, %v138
    %v140 = vlaneseq
    %v141 = vshrl.u32 %v140, 7
    %v142 = vsub.s32 1, %v141
    %v143 = vrot.slane %v134, %v142
    %v144 = vlaneseq
    %v145 = vshrl.u32 %v144, 7
    %v146 = vsub.s32 2, %v145
    %v147 = vrot.slane %v134, %v146
    %v148 = vlaneseq
    %v149 = vshrl.u32 %v148, 7
    %v150 = vsub.s32 3, %v149
    %v151 = vrot.slane %v134, %v150
    %v152 = vlaneseq
    %v153 = vshrl.u32 %v152, 7
    %v154 = vsub.s32 4, %v153
    %v155 = vrot.slane %v134, %v154
    %v156 = vlaneseq
    %v157 = vshrl.u32 %v156, 7
    %v158 = vsub.s32 5, %v157
    %v159 = vrot.slane %v134, %v158
    %v160 = vlaneseq
    %v161 = vshrl.u32 %v160, 7
    %v162 = vsub.s32 6, %v161
    %v163 = vrot.slane %v134, %v162
    %v164 = vcombine.low %v139, %v143
    %v165 = vcombine.low %v147, %v151
    %v167 = vunpack.c.l.s4 1983009808
    %v168 = vunpack.c.0.s8 %v167
    %v169 = vlaneseq
    %v170 = vshrl.u32 %v169, 7
    %v171 = vsub.s32 %v168, %v170
    %v172 = vrot.slane %v164, %v171
    %v174 = vunpack.c.l.s4 1983009808
    %v175 = vunpack.c.0.s8 %v174
    %v176 = vlaneseq
    %v177 = vshrl.u32 %v176, 7
    %v178 = vsub.s32 %v175, %v177
    %v179 = vrot.slane %v165, %v178
    %v180 = vcombine.low %v172, %v179
    %v181 = vcombine.low %v155, %v159
    %v183 = vunpack.c.l.s4 1983009808
    %v184 = vunpack.c.0.s8 %v183
    %v185 = vlaneseq
    %v186 = vshrl.u32 %v185, 7
    %v187 = vsub.s32 %v184, %v186
    %v188 = vrot.slane %v181, %v187
    %v190 = vunpack.c.l.s4 1983009808
    %v191 = vunpack.c.0.s8 %v190
    %v192 = vlaneseq
    %v193 = vshrl.u32 %v192, 7
    %v194 = vsub.s32 %v191, %v193
    %v195 = vrot.slane %v163, %v194
    %v196 = vcombine.low %v188, %v195
    %v199 = vmul.f32 %v132, %v180
    %v200 = vmul.f32 %v133, %v196
    %v201 = vld [vmem:[#allocation8] sm:$0xff]
    %v203 = vlaneseq
    %v204 = vshrl.u32 %v203, 7
    %v205 = vsub.s32 0, %v204
    %v206 = vrot.slane %v201, %v205
    %v207 = vlaneseq
    %v208 = vshrl.u32 %v207, 7
    %v209 = vsub.s32 1, %v208
    %v210 = vrot.slane %v201, %v209
    %v211 = vlaneseq
    %v212 = vshrl.u32 %v211, 7
    %v213 = vsub.s32 2, %v212
    %v214 = vrot.slane %v201, %v213
    %v215 = vlaneseq
    %v216 = vshrl.u32 %v215, 7
    %v217 = vsub.s32 3, %v216
    %v218 = vrot.slane %v201, %v217
    %v219 = vlaneseq
    %v220 = vshrl.u32 %v219, 7
    %v221 = vsub.s32 4, %v220
    %v222 = vrot.slane %v201, %v221
    %v223 = vlaneseq
    %v224 = vshrl.u32 %v223, 7
    %v225 = vsub.s32 5, %v224
    %v226 = vrot.slane %v201, %v225
    %v227 = vlaneseq
    %v228 = vshrl.u32 %v227, 7
    %v229 = vsub.s32 6, %v228
    %v230 = vrot.slane %v201, %v229
    %v231 = vcombine.low %v206, %v210
    %v232 = vcombine.low %v214, %v218
    %v234 = vunpack.c.l.s4 1983009808
    %v235 = vunpack.c.0.s8 %v234
    %v236 = vlaneseq
    %v237 = vshrl.u32 %v236, 7
    %v238 = vsub.s32 %v235, %v237
    %v239 = vrot.slane %v231, %v238
    %v241 = vunpack.c.l.s4 1983009808
    %v242 = vunpack.c.0.s8 %v241
    %v243 = vlaneseq
    %v244 = vshrl.u32 %v243, 7
    %v245 = vsub.s32 %v242, %v244
    %v246 = vrot.slane %v232, %v245
    %v247 = vcombine.low %v239, %v246
    %v248 = vcombine.low %v222, %v226
    %v250 = vunpack.c.l.s4 1983009808
    %v251 = vunpack.c.0.s8 %v250
    %v252 = vlaneseq
    %v253 = vshrl.u32 %v252, 7
    %v254 = vsub.s32 %v251, %v253
    %v255 = vrot.slane %v248, %v254
    %v257 = vunpack.c.l.s4 1983009808
    %v258 = vunpack.c.0.s8 %v257
    %v259 = vlaneseq
    %v260 = vshrl.u32 %v259, 7
    %v261 = vsub.s32 %v258, %v260
    %v262 = vrot.slane %v230, %v261
    %v263 = vcombine.low %v255, %v262
    %v266 = vadd.f32 %v199, %v247
    %v267 = vadd.f32 %v200, %v263
    %268 = vst [vmem:[#allocation10] sm:$0xff] %v266
    %269 = vst [vmem:[#allocation10 + $0x8] sm:$0x3f] %v267
    // Predicated region
    $region34: #{tpu_custom_call.1} parent=1 // pred_check
      _
    $region35: #{tpu_custom_call.1} parent=1 // pred_check_branch
      %271 = sbr.rel (0) target = $region37
    $region36: #{tpu_custom_call.1} parent=1 // pred_region
      %s273 = ssub.s32 224, 224
      %274 = vsyncadd [#allocation4], %s273
      %s276 = sshll.u32 [#allocation10], 4
      %s277 = int_to_ptr.vmem [resolvable:$true] %s276
      %279 = dma.vmem_to_hbm [thread:$0]  %s277, 224, %s4, [#allocation4]
    $region37: #{tpu_custom_call.1} parent=1 // pred_fallthru
      _
    // Predicated region
    $region38: #{tpu_custom_call.1} parent=1 // pred_check
      _
    $region39: #{tpu_custom_call.1} parent=1 // pred_check_branch
      %281 = sbr.rel (0) target = $region41
    $region40: #{tpu_custom_call.1} parent=1 // pred_region
      %282 = dma.done [#allocation4], 224
    $region41: #{tpu_custom_call.1} parent=1 // pred_fallthru
      _
    %283 = vsyncpa [#allocation3], 1
    %284 = vsyncpa [#allocation6], 1
    %285 = vsyncpa [#allocation9], 1
    %286 = vsyncpa [#allocation4], 1

</llo_original>
